<compile_context>
chip_gen: v5e
topology: v5e:2x2
jax: 0.10.0
libtpu: 0.0.40
codegen_flags: <defaults>
</compile_context>

<pallas_src>
import functools

import jax
import jax.numpy as jnp
from jax.experimental import pallas as pl
from jax.experimental.pallas import tpu as pltpu


def _round_up(n, m):
    return ((n + m - 1) // m) * m


def dqn_kernel(x_ref, w1_ref, b1_ref, w2_ref, b2_ref, out_ref):
    # x_ref: (tb, In) f32   | w1_ref: (In, H) f32 | b1_ref: (1, H) f32
    # w2_ref: (H, Out) f32  | b2_ref: (1, Out) f32 | out_ref: (tb, Out) f32
    x = x_ref[...]
    # fc1 on the MXU with f32 accumulation; bias add + ReLU on the VPU.
    h = jnp.dot(x, w1_ref[...], preferred_element_type=jnp.float32)
    h = jnp.maximum(h + b1_ref[...], 0.0)
    # fc2 on the MXU.
    y = jnp.dot(h, w2_ref[...], preferred_element_type=jnp.float32)
    out_ref[...] = (y + b2_ref[...]).astype(out_ref.dtype)


@functools.partial(jax.jit, static_argnames=("block_batch",))
def dqn_forward(state, w1, b1, w2, b2, *, block_batch=1024):
    """state: (B, input_size) f32. w1: (In, 64), b1: (64,), w2: (64, Out), b2: (Out,).

    Returns (B, output_size) f32.
    """
    B, in_size = state.shape
    hidden = w1.shape[1]
    out_size = w2.shape[1]

    # Batch tile: multiple of 8, capped at block_batch, and sized so the grid has
    # >= 2 steps whenever B allows (lets the 2 TensorCores on v7x split the work).
    half = _round_up(max(pl.cdiv(B, 2), 1), 8)
    tb = max(8, min(block_batch, half))

    # Pad the batch only to a multiple of 8 (no round_up(B, tb) over-padding);
    # Pallas handles a partial tail block via masked writes / padded reads.
    b_pad = _round_up(B, 8)
    if b_pad != B:
        state = jnp.pad(state, ((0, b_pad - B), (0, 0)))
    grid = (pl.cdiv(b_pad, tb),)

    b1_2d = b1.reshape(1, hidden).astype(jnp.float32)
    b2_2d = b2.reshape(1, out_size).astype(jnp.float32)

    flops = 2 * b_pad * (in_size * hidden + hidden * out_size)
    bytes_accessed = (
        b_pad * in_size * 4 + b_pad * out_size * 4        # streamed x / out
        + (in_size * hidden + hidden * out_size) * 4      # pinned weights
        + (hidden + out_size) * 4)                        # biases

    out = pl.pallas_call(
        dqn_kernel,
        out_shape=jax.ShapeDtypeStruct((b_pad, out_size), jnp.float32),
        grid=grid,
        in_specs=[
            pl.BlockSpec((tb, in_size), lambda i: (i, 0)),       # x: streamed per tile
            pl.BlockSpec((in_size, hidden), lambda i: (0, 0)),   # w1: pinned in VMEM
            pl.BlockSpec((1, hidden), lambda i: (0, 0)),         # b1: pinned
            pl.BlockSpec((hidden, out_size), lambda i: (0, 0)),  # w2: pinned
            pl.BlockSpec((1, out_size), lambda i: (0, 0)),       # b2: pinned
        ],
        out_specs=pl.BlockSpec((tb, out_size), lambda i: (i, 0)),
        compiler_params=pltpu.CompilerParams(
            dimension_semantics=("parallel",)),
        cost_estimate=pl.CostEstimate(
            flops=flops, transcendentals=0, bytes_accessed=bytes_accessed),
    )(state, w1, b1_2d, w2, b2_2d)

    return out[:B]


def init_dqn_params(key, input_size, output_size, hidden=64):
    """Deterministic init mimicking nn.Linear's U(-1/sqrt(fan_in), 1/sqrt(fan_in))."""
    k1, k2, k3, k4 = jax.random.split(key, 4)
    lim1 = 1.0 / jnp.sqrt(jnp.float32(input_size))
    lim2 = 1.0 / jnp.sqrt(jnp.float32(hidden))
    w1 = jax.random.uniform(k1, (input_size, hidden), jnp.float32, -lim1, lim1)
    b1 = jax.random.uniform(k2, (hidden,), jnp.float32, -lim1, lim1)
    w2 = jax.random.uniform(k3, (hidden, output_size), jnp.float32, -lim2, lim2)
    b2 = jax.random.uniform(k4, (output_size,), jnp.float32, -lim2, lim2)
    return w1, b1, w2, b2


if __name__ == "__main__":
    key = jax.random.PRNGKey(0)
    kx, kp = jax.random.split(key)

    batch = 2
    input_size = 16
    output_size = 8

    state = jax.random.normal(kx, (batch, input_size), jnp.float32)
    w1, b1, w2, b2 = init_dqn_params(kp, input_size, output_size)

    out = jax.block_until_ready(dqn_forward(state, w1, b1, w2, b2))

    # Full-f32 reference (PyTorch semantics). Loose tolerance covers any
    # MXU default-precision difference between in-kernel and reference dots.
    h_ref = jnp.maximum(
        jnp.dot(state, w1, precision=jax.lax.Precision.HIGHEST) + b1, 0.0)
    ref = jnp.dot(h_ref, w2, precision=jax.lax.Precision.HIGHEST) + b2

    assert out.shape == (batch, output_size)
    assert jnp.allclose(out, ref, atol=2e-2, rtol=2e-2)
    assert bool(jnp.isfinite(out).all())

    print("KERNEL_OK")
</pallas_src>

<mosaic_0001>
module attributes {stable_mosaic.version = 11 : i64} {
  func.func @dqn_kernel(%arg0: i32, %arg1: memref<8x16xf32, #tpu.memory_space<vmem>>, %arg2: memref<16x64xf32, #tpu.memory_space<vmem>>, %arg3: memref<1x64xf32, #tpu.memory_space<vmem>>, %arg4: memref<64x8xf32, #tpu.memory_space<vmem>>, %arg5: memref<1x8xf32, #tpu.memory_space<vmem>>, %arg6: memref<8x8xf32, #tpu.memory_space<vmem>>) attributes {dimension_semantics = [#tpu.dimension_semantics<parallel>], iteration_bounds = array<i64: 1>, scalar_prefetch = 0 : i64, scratch_operands = 0 : i64, tpu.core_type = #tpu.core_type<tc>, window_params = [{transform_indices = @transform_0, window_bounds = array<i64: 8, 16>}, {pipeline_mode = #tpu.pipeline_mode<synchronous>, transform_indices = @transform_1, window_bounds = array<i64: 16, 64>}, {pipeline_mode = #tpu.pipeline_mode<synchronous>, transform_indices = @transform_2, window_bounds = array<i64: 1, 64>}, {pipeline_mode = #tpu.pipeline_mode<synchronous>, transform_indices = @transform_3, window_bounds = array<i64: 64, 8>}, {pipeline_mode = #tpu.pipeline_mode<synchronous>, transform_indices = @transform_4, window_bounds = array<i64: 1, 8>}, {transform_indices = @transform_5, window_bounds = array<i64: 8, 8>}]} {
    %c0 = arith.constant 0 : index
    %c0_0 = arith.constant 0 : index
    %0 = vector.load %arg1[%c0, %c0_0] : memref<8x16xf32, #tpu.memory_space<vmem>>, vector<8x16xf32>
    %c0_1 = arith.constant 0 : index
    %c0_2 = arith.constant 0 : index
    %1 = vector.load %arg2[%c0_1, %c0_2] : memref<16x64xf32, #tpu.memory_space<vmem>>, vector<16x64xf32>
    %cst = arith.constant dense<0.000000e+00> : vector<8x64xf32>
    %2 = tpu.matmul %0, %1, %cst {dimension_numbers = #tpu.dot_dimension_numbers<[1], [0], [0], [1], [0, 0, 1, 1], [], []>} : vector<8x16xf32>, vector<16x64xf32>, vector<8x64xf32> -> vector<8x64xf32>
    %c0_3 = arith.constant 0 : index
    %c0_4 = arith.constant 0 : index
    %3 = vector.load %arg3[%c0_3, %c0_4] : memref<1x64xf32, #tpu.memory_space<vmem>>, vector<1x64xf32>
    %4 = vector.broadcast %3 : vector<1x64xf32> to vector<8x64xf32>
    %5 = arith.addf %2, %4 : vector<8x64xf32>
    %cst_5 = arith.constant 0.000000e+00 : f32
    %6 = vector.broadcast %cst_5 : f32 to vector<8x64xf32>
    %7 = arith.maximumf %5, %6 : vector<8x64xf32>
    %c0_6 = arith.constant 0 : index
    %c0_7 = arith.constant 0 : index
    %8 = vector.load %arg4[%c0_6, %c0_7] : memref<64x8xf32, #tpu.memory_space<vmem>>, vector<64x8xf32>
    %cst_8 = arith.constant dense<0.000000e+00> : vector<8x8xf32>
    %9 = tpu.matmul %7, %8, %cst_8 {dimension_numbers = #tpu.dot_dimension_numbers<[1], [0], [0], [1], [0, 0, 1, 1], [], []>} : vector<8x64xf32>, vector<64x8xf32>, vector<8x8xf32> -> vector<8x8xf32>
    %c0_9 = arith.constant 0 : index
    %c0_10 = arith.constant 0 : index
    %10 = vector.load %arg5[%c0_9, %c0_10] : memref<1x8xf32, #tpu.memory_space<vmem>>, vector<1x8xf32>
    %11 = vector.broadcast %10 : vector<1x8xf32> to vector<8x8xf32>
    %12 = arith.addf %9, %11 : vector<8x8xf32>
    %c0_11 = arith.constant 0 : index
    %c0_12 = arith.constant 0 : index
    %13 = vector.load %arg6[%c0_11, %c0_12] : memref<8x8xf32, #tpu.memory_space<vmem>>, vector<8x8xf32>
    tpu.vector_store %arg6[%c0_11, %c0_12], %12 {strides = array<i32>} : memref<8x8xf32, #tpu.memory_space<vmem>>, vector<8x8xf32>,
    return
  }
  func.func @transform_0(%arg0: i32) -> (i32, i32) {
    %c0_i32 = arith.constant 0 : i32
    %c0_i32_0 = arith.constant 0 : i32
    return %arg0, %c0_i32 : i32, i32
  }
  func.func @transform_1(%arg0: i32) -> (i32, i32) {
    %c0_i32 = arith.constant 0 : i32
    %c0_i32_0 = arith.constant 0 : i32
    %c0_i32_1 = arith.constant 0 : i32
    return %c0_i32, %c0_i32_0 : i32, i32
  }
  func.func @transform_2(%arg0: i32) -> (i32, i32) {
    %c0_i32 = arith.constant 0 : i32
    %c0_i32_0 = arith.constant 0 : i32
    %c0_i32_1 = arith.constant 0 : i32
    return %c0_i32, %c0_i32_0 : i32, i32
  }
  func.func @transform_3(%arg0: i32) -> (i32, i32) {
    %c0_i32 = arith.constant 0 : i32
    %c0_i32_0 = arith.constant 0 : i32
    %c0_i32_1 = arith.constant 0 : i32
    return %c0_i32, %c0_i32_0 : i32, i32
  }
  func.func @transform_4(%arg0: i32) -> (i32, i32) {
    %c0_i32 = arith.constant 0 : i32
    %c0_i32_0 = arith.constant 0 : i32
    %c0_i32_1 = arith.constant 0 : i32
    return %c0_i32, %c0_i32_0 : i32, i32
  }
  func.func @transform_5(%arg0: i32) -> (i32, i32) {
    %c0_i32 = arith.constant 0 : i32
    %c0_i32_0 = arith.constant 0 : i32
    return %arg0, %c0_i32 : i32, i32
  }
}

</mosaic_0001>

<llo_original>
// kernel: dqn_forward.1
$region0: #{dqn_forward.1}
  #allocation0 [shape = 'u32[]', space=smem, size = 0x4, offset = 0x4, fixed_abs, tag = 'smem constant byte address 0x4 - core index']
  #allocation1 [shape = 'u32[72,128]{1,0:T(1,128)}', space=vmem, size = 0x9000, scoped, tag = 'internal scratch']
  %s0 = inlined_call_operand.vmem [shape: f32[8,16], index: 0, kind: input, shape index: {}]
  %s1 = inlined_call_operand.vmem [shape: f32[16,64], index: 1, kind: input, shape index: {}]
  %s2 = inlined_call_operand.vmem [shape: f32[1,64], index: 2, kind: input, shape index: {}]
  %s3 = inlined_call_operand.vmem [shape: f32[64,8], index: 3, kind: input, shape index: {}]
  %s4 = inlined_call_operand.vmem [shape: f32[1,8], index: 4, kind: input, shape index: {}]
  %s5 = inlined_call_operand.vmem [shape: f32[8,8], index: 5, kind: output, shape index: {}]
  %s6 = sld [smem:[#allocation0]]
  $region30: #{dqn_forward.1} parent=0
    _
  %s8 = ssub.s32 1, %s6
  %s9 = scalar_select 0, %s8, %s6
  // Predicated region
  $region2: #{dqn_forward.1} parent=0 // pred_check
    _
  $region3: #{dqn_forward.1} parent=0 // pred_check_branch
    %11 = sbr.rel (0) target = $region5
  $region4: #{dqn_forward.1} parent=0 // pred_region
    _
  $region5: #{dqn_forward.1} parent=0 // pred_fallthru
    _
  // Predicated region
  $region6: #{dqn_forward.1} parent=0 // pred_check
    _
  $region7: #{dqn_forward.1} parent=0 // pred_check_branch
    %13 = sbr.rel (0) target = $region9
  $region8: #{dqn_forward.1} parent=0 // pred_region
    _
  $region9: #{dqn_forward.1} parent=0 // pred_fallthru
    _
  // Predicated region
  $region10: #{dqn_forward.1} parent=0 // pred_check
    _
  $region11: #{dqn_forward.1} parent=0 // pred_check_branch
    %15 = sbr.rel (0) target = $region13
  $region12: #{dqn_forward.1} parent=0 // pred_region
    _
  $region13: #{dqn_forward.1} parent=0 // pred_fallthru
    _
  // Predicated region
  $region14: #{dqn_forward.1} parent=0 // pred_check
    _
  $region15: #{dqn_forward.1} parent=0 // pred_check_branch
    %17 = sbr.rel (0) target = $region17
  $region16: #{dqn_forward.1} parent=0 // pred_region
    _
  $region17: #{dqn_forward.1} parent=0 // pred_fallthru
    _
  // Predicated region
  $region18: #{dqn_forward.1} parent=0 // pred_check
    _
  $region19: #{dqn_forward.1} parent=0 // pred_check_branch
    %19 = sbr.rel (0) target = $region21
  $region20: #{dqn_forward.1} parent=0 // pred_region
    _
  $region21: #{dqn_forward.1} parent=0 // pred_fallthru
    _
  %v20 = vld [vmem:[%s0] sm:$0xff]
  %v21 = vld [vmem:[%s1] sm:$0xff]
  %v22 = vld [vmem:[%s1 + $0x8] sm:$0xff]
  %v23 = vld [vmem:[%s2] sm:$0x1]
  %v25 = vperm.slane %v23, 0
  %vm27 = vcmask 130048
  %v29 = vsel %vm27, %v20, 0
  %31 = vmatpush.msra.mxu0 0.0
  %32 = vmatpush.msra.mxu0 0.0
  %33 = vmatpush.msra.mxu0 0.0
  %34 = vmatpush.msra.mxu0 0.0
  %35 = vmatpush.msra.mxu0 0.0
  %36 = vmatpush.msra.mxu0 0.0
  %37 = vmatpush.msra.mxu0 0.0
  %38 = vmatpush.msra.mxu0 0.0
  %39 = vmatpush.msra.mxu0 0.0
  %40 = vmatpush.msra.mxu0 0.0
  %41 = vmatpush.msra.mxu0 0.0
  %42 = vmatpush.msra.mxu0 0.0
  %43 = vmatpush.msra.mxu0 0.0
  %44 = vmatpush.msra.mxu0 0.0
  %45 = vmatpush.msra.mxu0 %v22
  %46 = vmatpush.msra.mxu0 %v21
  %47 = vmatmul.f32.gmra.mxu0 %v29
  %v48 = vpop.f32.mrf.mxu0
  %v49 = vadd.f32 %v25, %v48
  %50 = vdwg.mxu0
  %v51 = vmax.f32 %v49, 0.0
  %v52 = vld [vmem:[%s3] sm:$0xff]
  %v53 = vld [vmem:[%s3 + $0x8] sm:$0xff]
  %v54 = vld [vmem:[%s3 + $0x10] sm:$0xff]
  %v55 = vld [vmem:[%s3 + $0x18] sm:$0xff]
  %v56 = vld [vmem:[%s3 + $0x20] sm:$0xff]
  %v57 = vld [vmem:[%s3 + $0x28] sm:$0xff]
  %v58 = vld [vmem:[%s3 + $0x30] sm:$0xff]
  %v59 = vld [vmem:[%s3 + $0x38] sm:$0xff]
  %v60 = vld [vmem:[%s4] sm:$0x1]
  %v62 = vperm.slane %v60, 0
  %vm64 = vcmask 523264
  %v66 = vsel %vm64, %v51, 0
  %68 = vmatpush.msra.mxu0 0.0
  %69 = vmatpush.msra.mxu0 0.0
  %70 = vmatpush.msra.mxu0 0.0
  %71 = vmatpush.msra.mxu0 0.0
  %72 = vmatpush.msra.mxu0 0.0
  %73 = vmatpush.msra.mxu0 0.0
  %74 = vmatpush.msra.mxu0 0.0
  %75 = vmatpush.msra.mxu0 0.0
  %76 = vmatpush.msra.mxu0 %v59
  %77 = vmatpush.msra.mxu0 %v58
  %78 = vmatpush.msra.mxu0 %v57
  %79 = vmatpush.msra.mxu0 %v56
  %80 = vmatpush.msra.mxu0 %v55
  %81 = vmatpush.msra.mxu0 %v54
  %82 = vmatpush.msra.mxu0 %v53
  %83 = vmatpush.msra.mxu0 %v52
  %84 = vmatmul.f32.gmra.mxu0 %v66
  %v85 = vpop.f32.mrf.mxu0
  %v86 = vadd.f32 %v62, %v85
  %87 = vdwg.mxu0
  %vm88 = vcmask 64512
  %89 = vst.msk [vmem:[%s5] sm:$0xff] %vm88, %v86
  // Predicated region
  $region22: #{dqn_forward.1} parent=0 // pred_check
    _
  $region23: #{dqn_forward.1} parent=0 // pred_check_branch
    %91 = sbr.rel (0) target = $region25
  $region24: #{dqn_forward.1} parent=0 // pred_region
    _
  $region25: #{dqn_forward.1} parent=0 // pred_fallthru
    _
  // Predicated region
  $region26: #{dqn_forward.1} parent=0 // pred_check
    _
  $region27: #{dqn_forward.1} parent=0 // pred_check_branch
    %93 = sbr.rel (0) target = $region29
  $region28: #{dqn_forward.1} parent=0 // pred_region
    _
  $region29: #{dqn_forward.1} parent=0 // pred_fallthru
    _

</llo_original>
